<compile_context>
chip_gen: v5e
topology: v5e:2x2
jax: 0.10.0
libtpu: 0.0.40
codegen_flags: <defaults>
</compile_context>

<pallas_src>
import functools
from math import sqrt

import jax
import jax.numpy as jnp
from jax import lax
from jax.experimental import pallas as pl
from jax.experimental.pallas import tpu as pltpu


_MiB = 1024 * 1024
# Cap on scalar-prefetched ids per pallas_call (1-D SMEM pads to next_pow2(4N) B).
_MAX_IDS_PER_CALL = 64 * 1024
# Target per-step output tile size (amortizes ~0.35 us per-step overhead).
_TARGET_TILE_BYTES = 1 * _MiB
_MAX_BLOCK_TOKENS = 2048


def _round_up(x, m):
    return ((x + m - 1) // m) * m


def _vmem_capacity_bytes():
    try:
        return int(pltpu.get_tpu_info().vmem_capacity_bytes)
    except Exception:
        return 64 * _MiB  # conservative fallback (v7x per-TC VMEM)


def _choose_block_tokens(n_tokens, row_bytes):
    """Pick tokens-per-step T (multiple of 8); prefer a T that divides N exactly."""
    t_target = _TARGET_TILE_BYTES // max(1, row_bytes)
    t_target = max(8, min(_MAX_BLOCK_TOKENS, (t_target // 8) * 8))
    if n_tokens >= 8 and n_tokens % 8 == 0:
        t = min(t_target, n_tokens)
        while t >= 8 and n_tokens % t != 0:
            t -= 8
        # Accept the divisor unless it is far below the target tile size.
        if t >= 8 and (t * 4 >= min(t_target, n_tokens) or t == n_tokens):
            return t, n_tokens
    t = min(t_target, _round_up(n_tokens, 8))
    return t, _round_up(n_tokens, t)


def _embed_resident_kernel(ids_ref, table_ref, out_ref, *, scale, block_tokens):
    """VMEM-resident table: gather 8-row groups, full-sublane stores.

    ids_ref   : SMEM (chunk_tokens,) int32 scalar-prefetched token ids
    table_ref : VMEM (vocab, d_model) full table (constant index_map -> loaded once)
    out_ref   : VMEM (block_tokens, d_model) output tile for this grid step
    """
    base = pl.program_id(0) * block_tokens
    num_groups = block_tokens // 8

    def group_body(g, carry):
        row0 = base + g * 8
        # 8 per-row dynamic slices assembled into one full-sublane block.
        rows = [table_ref[pl.ds(ids_ref[row0 + t], 1), :] for t in range(8)]
        block = jnp.concatenate(rows, axis=0)                       # (8, d_model)
        # One full-vreg scale + cast per group (not per row).
        block = (block.astype(jnp.float32) * scale).astype(out_ref.dtype)
        out_ref[pl.ds(pl.multiple_of(g * 8, 8), 8), :] = block      # unmasked store
        return carry

    lax.fori_loop(0, num_groups, group_body, 0, unroll=2)


def _embed_hbm_gather_kernel(ids_ref, table_hbm, out_ref, rows_vmem, copy_sems,
                             *, scale, block_tokens):
    """HBM-resident table: double-buffered per-row DMA gather across grid steps.

    ids_ref   : SMEM (chunk_tokens,) int32 token ids
    table_hbm : HBM (vocab, d_model) table (memory_space=pl.ANY, no auto-DMA)
    out_ref   : VMEM (block_tokens, d_model) output tile
    rows_vmem : VMEM (2, block_tokens, d_model) double-buffered gather scratch
    copy_sems : DMA semaphores, one per buffer slot
    """
    i = pl.program_id(0)
    nblocks = pl.num_programs(0)
    slot = i % 2

    def issue(block_idx, s):
        base = block_idx * block_tokens

        def body(t, carry):
            idx = ids_ref[base + t]                      # SMEM read before any wait
            pltpu.make_async_copy(
                table_hbm.at[pl.ds(idx, 1), :],          # (1, d_model) row in HBM
                rows_vmem.at[s, pl.ds(t, 1), :],         # (1, d_model) slot in VMEM
                copy_sems.at[s],
            ).start()
            return carry

        lax.fori_loop(0, block_tokens, body, 0, unroll=8)

    @pl.when(i == 0)
    def _():
        issue(0, 0)                                      # prime slot 0 with block 0

    @pl.when(i + 1 < nblocks)
    def _():
        issue(i + 1, 1 - slot)                           # prefetch next block

    # Wait for the block_tokens identical-size row copies landing in `slot`.
    def wait_body(t, carry):
        pltpu.make_async_copy(
            table_hbm.at[pl.ds(0, 1), :],
            rows_vmem.at[slot, pl.ds(0, 1), :],
            copy_sems.at[slot],
        ).wait()
        return carry

    lax.fori_loop(0, block_tokens, wait_body, 0, unroll=8)

    # Whole-tile scale + cast, single dense store.
    tile = rows_vmem[slot].astype(jnp.float32) * scale
    out_ref[...] = tile.astype(out_ref.dtype)


def embeddings_forward(ids, table, *, block_tokens=None, force_hbm_gather=False):
    """ids: integer token ids (any shape); table: (vocab, d_model) embedding weights."""
    vocab, d_model = table.shape
    ids_shape = tuple(int(s) for s in ids.shape)
    N = 1
    for s in ids_shape:
        N *= s
    scale = float(sqrt(d_model))
    itemsize = jnp.dtype(table.dtype).itemsize
    row_bytes = d_model * itemsize

    if block_tokens is not None:
        T = max(8, (int(block_tokens) // 8) * 8)
        N_pad = _round_up(N, T)
    else:
        T, N_pad = _choose_block_tokens(N, row_bytes)

    flat_ids = ids.reshape(N).astype(jnp.int32)
    if N_pad != N:
        flat_ids = jnp.pad(flat_ids, (0, N_pad - N))     # pad with valid row 0

    # --- Generation-aware VMEM budgeting -------------------------------------
    vmem_cap = _vmem_capacity_bytes()
    usable_vmem = (vmem_cap * 7) // 8                    # headroom for internal scratch
    table_bytes = vocab * d_model * itemsize
    out_tile_bytes = T * row_bytes
    # Assume the pipeline may double-buffer the constant-index table, plus
    # double-buffered output tiles, plus slack.
    resident_need = 2 * table_bytes + 2 * out_tile_bytes + 2 * _MiB
    use_resident = (not force_hbm_gather) and resident_need <= usable_vmem

    num_blocks_total = N_pad // T
    blocks_per_call = max(1, _MAX_IDS_PER_CALL // T)

    if use_resident:
        kernel = functools.partial(_embed_resident_kernel, scale=scale, block_tokens=T)
        vmem_limit = int(min(usable_vmem, max(resident_need + 4 * _MiB, 32 * _MiB)))

        def run(ids_chunk, nb):
            return pl.pallas_call(
                kernel,
                out_shape=jax.ShapeDtypeStruct((nb * T, d_model), table.dtype),
                grid_spec=pltpu.PrefetchScalarGridSpec(
                    num_scalar_prefetch=1,
                    grid=(nb,),
                    in_specs=[
                        # Full table, constant block index -> loaded once, resident.
                        pl.BlockSpec((vocab, d_model), lambda i, ids_sm: (0, 0)),
                    ],
                    out_specs=pl.BlockSpec((T, d_model), lambda i, ids_sm: (i, 0)),
                ),
                compiler_params=pltpu.CompilerParams(
                    dimension_semantics=("parallel",),   # independent blocks (2 TCs on v7x)
                    vmem_limit_bytes=vmem_limit,
                ),
            )(ids_chunk, table)
    else:
        kernel = functools.partial(_embed_hbm_gather_kernel, scale=scale, block_tokens=T)
        vmem_limit = int(min(usable_vmem, max(8 * out_tile_bytes + 4 * _MiB, 32 * _MiB)))

        def run(ids_chunk, nb):
            return pl.pallas_call(
                kernel,
                out_shape=jax.ShapeDtypeStruct((nb * T, d_model), table.dtype),
                grid_spec=pltpu.PrefetchScalarGridSpec(
                    num_scalar_prefetch=1,
                    grid=(nb,),
                    in_specs=[pl.BlockSpec(memory_space=pl.ANY)],   # table stays in HBM
                    out_specs=pl.BlockSpec((T, d_model), lambda i, ids_sm: (i, 0)),
                    scratch_shapes=[
                        pltpu.VMEM((2, T, d_model), table.dtype),   # double-buffered gather
                        pltpu.SemaphoreType.DMA((2,)),
                    ],
                ),
                compiler_params=pltpu.CompilerParams(
                    # Cross-step double buffering requires strictly sequential iteration.
                    dimension_semantics=("arbitrary",),
                    vmem_limit_bytes=vmem_limit,
                ),
            )(ids_chunk, table)

    # Stream ids in chunks so the SMEM-prefetched id vector stays small.
    outs = []
    for b0 in range(0, num_blocks_total, blocks_per_call):
        nb = min(blocks_per_call, num_blocks_total - b0)
        ids_chunk = flat_ids[b0 * T:(b0 + nb) * T]
        outs.append(run(ids_chunk, nb))
    out_flat = outs[0] if len(outs) == 1 else jnp.concatenate(outs, axis=0)

    if N_pad != N:
        out_flat = out_flat[:N]
    return out_flat.reshape(*ids_shape, d_model)


if __name__ == "__main__":
    # Small, deterministic setup consistent with the module's __init__/forward.
    d_model = 128
    vocab = 64
    B, S = 2, 8

    key = jax.random.PRNGKey(0)
    k_tab, k_ids = jax.random.split(key)

    # nn.Embedding default init: weight ~ N(0, 1), shape (vocab, d_model)
    table = jax.random.normal(k_tab, (vocab, d_model), dtype=jnp.float32)
    ids = jax.random.randint(k_ids, (B, S), 0, vocab, dtype=jnp.int32)

    ref = jnp.take(table, ids, axis=0) * sqrt(d_model)

    # 1) Fast path: VMEM-resident table, grouped full-sublane gather/store.
    out = jax.block_until_ready(embeddings_forward(ids, table))
    assert out.shape == (B, S, d_model), out.shape
    assert out.dtype == jnp.float32, out.dtype
    assert jnp.allclose(out, ref, atol=1e-5, rtol=1e-5), "resident path mismatch"

    # 2) Large-vocab path: HBM table + double-buffered per-row DMA gather
    #    (forced here on the small table just to exercise/verify the code path).
    out_hbm = jax.block_until_ready(
        embeddings_forward(ids, table, force_hbm_gather=True))
    assert jnp.allclose(out_hbm, ref, atol=1e-5, rtol=1e-5), "HBM-gather path mismatch"

    # 3) Token count not a multiple of 8 exercises the pad + tail-slice path.
    ids_odd = ids.reshape(-1)[:10].reshape(2, 5)
    ref_odd = jnp.take(table, ids_odd, axis=0) * sqrt(d_model)
    out_odd = jax.block_until_ready(embeddings_forward(ids_odd, table))
    assert out_odd.shape == (2, 5, d_model), out_odd.shape
    assert jnp.allclose(out_odd, ref_odd, atol=1e-5, rtol=1e-5), "padded path mismatch"

    print("KERNEL_OK")
</pallas_src>

<mosaic_0001>
module attributes {stable_mosaic.version = 11 : i64} {
  func.func @_embed_resident_kernel(%arg0: i32, %arg1: memref<16xi32, #tpu.memory_space<smem>>, %arg2: memref<64x128xf32, #tpu.memory_space<vmem>>, %arg3: memref<16x128xf32, #tpu.memory_space<vmem>>) attributes {dimension_semantics = [#tpu.dimension_semantics<parallel>], iteration_bounds = array<i64: 1>, scalar_prefetch = 1 : i64, scratch_operands = 0 : i64, tpu.core_type = #tpu.core_type<tc>, window_params = [{pipeline_mode = #tpu.pipeline_mode<synchronous>, transform_indices = @transform_0, window_bounds = array<i64: 64, 128>}, {transform_indices = @transform_1, window_bounds = array<i64: 16, 128>}]} {
    %c16_i32 = arith.constant 16 : i32
    %0 = arith.muli %arg0, %c16_i32 : i32
    %c0_i32 = arith.constant 0 : i32
    %c8_i32 = arith.constant 8 : i32
    %1 = arith.muli %c0_i32, %c8_i32 : i32
    %2 = arith.addi %0, %1 : i32
    %c0_i32_0 = arith.constant 0 : i32
    %3 = arith.addi %2, %c0_i32_0 : i32
    %4 = arith.index_cast %3 : i32 to index
    %5 = memref.load %arg1[%4] : memref<16xi32, #tpu.memory_space<smem>>
    %6 = arith.index_cast %5 : i32 to index
    %c0 = arith.constant 0 : index
    %7 = vector.load %arg2[%6, %c0] : memref<64x128xf32, #tpu.memory_space<vmem>>, vector<1x128xf32>
    %c1_i32 = arith.constant 1 : i32
    %8 = arith.addi %2, %c1_i32 : i32
    %9 = arith.index_cast %8 : i32 to index
    %10 = memref.load %arg1[%9] : memref<16xi32, #tpu.memory_space<smem>>
    %11 = arith.index_cast %10 : i32 to index
    %c0_1 = arith.constant 0 : index
    %12 = vector.load %arg2[%11, %c0_1] : memref<64x128xf32, #tpu.memory_space<vmem>>, vector<1x128xf32>
    %c2_i32 = arith.constant 2 : i32
    %13 = arith.addi %2, %c2_i32 : i32
    %14 = arith.index_cast %13 : i32 to index
    %15 = memref.load %arg1[%14] : memref<16xi32, #tpu.memory_space<smem>>
    %16 = arith.index_cast %15 : i32 to index
    %c0_2 = arith.constant 0 : index
    %17 = vector.load %arg2[%16, %c0_2] : memref<64x128xf32, #tpu.memory_space<vmem>>, vector<1x128xf32>
    %c3_i32 = arith.constant 3 : i32
    %18 = arith.addi %2, %c3_i32 : i32
    %19 = arith.index_cast %18 : i32 to index
    %20 = memref.load %arg1[%19] : memref<16xi32, #tpu.memory_space<smem>>
    %21 = arith.index_cast %20 : i32 to index
    %c0_3 = arith.constant 0 : index
    %22 = vector.load %arg2[%21, %c0_3] : memref<64x128xf32, #tpu.memory_space<vmem>>, vector<1x128xf32>
    %c4_i32 = arith.constant 4 : i32
    %23 = arith.addi %2, %c4_i32 : i32
    %24 = arith.index_cast %23 : i32 to index
    %25 = memref.load %arg1[%24] : memref<16xi32, #tpu.memory_space<smem>>
    %26 = arith.index_cast %25 : i32 to index
    %c0_4 = arith.constant 0 : index
    %27 = vector.load %arg2[%26, %c0_4] : memref<64x128xf32, #tpu.memory_space<vmem>>, vector<1x128xf32>
    %c5_i32 = arith.constant 5 : i32
    %28 = arith.addi %2, %c5_i32 : i32
    %29 = arith.index_cast %28 : i32 to index
    %30 = memref.load %arg1[%29] : memref<16xi32, #tpu.memory_space<smem>>
    %31 = arith.index_cast %30 : i32 to index
    %c0_5 = arith.constant 0 : index
    %32 = vector.load %arg2[%31, %c0_5] : memref<64x128xf32, #tpu.memory_space<vmem>>, vector<1x128xf32>
    %c6_i32 = arith.constant 6 : i32
    %33 = arith.addi %2, %c6_i32 : i32
    %34 = arith.index_cast %33 : i32 to index
    %35 = memref.load %arg1[%34] : memref<16xi32, #tpu.memory_space<smem>>
    %36 = arith.index_cast %35 : i32 to index
    %c0_6 = arith.constant 0 : index
    %37 = vector.load %arg2[%36, %c0_6] : memref<64x128xf32, #tpu.memory_space<vmem>>, vector<1x128xf32>
    %c7_i32 = arith.constant 7 : i32
    %38 = arith.addi %2, %c7_i32 : i32
    %39 = arith.index_cast %38 : i32 to index
    %40 = memref.load %arg1[%39] : memref<16xi32, #tpu.memory_space<smem>>
    %41 = arith.index_cast %40 : i32 to index
    %c0_7 = arith.constant 0 : index
    %42 = vector.load %arg2[%41, %c0_7] : memref<64x128xf32, #tpu.memory_space<vmem>>, vector<1x128xf32>
    %43 = tpu.concatenate %7, %12, %17, %22, %27, %32, %37, %42 in 0 : vector<1x128xf32>, vector<1x128xf32>, vector<1x128xf32>, vector<1x128xf32>, vector<1x128xf32>, vector<1x128xf32>, vector<1x128xf32>, vector<1x128xf32> -> vector<8x128xf32>
    %cst = arith.constant 11.3137083 : f32
    %44 = vector.broadcast %cst : f32 to vector<8x128xf32>
    %45 = arith.mulf %43, %44 : vector<8x128xf32>
    %c8_i32_8 = arith.constant 8 : i32
    %46 = arith.muli %c0_i32, %c8_i32_8 : i32
    %47 = tpu.assume_multiple %46, 8 : i32
    %48 = arith.index_cast %47 : i32 to index
    %c0_9 = arith.constant 0 : index
    %49 = vector.load %arg3[%48, %c0_9] : memref<16x128xf32, #tpu.memory_space<vmem>>, vector<8x128xf32>
    tpu.vector_store %arg3[%48, %c0_9], %45 {strides = array<i32>} : memref<16x128xf32, #tpu.memory_space<vmem>>, vector<8x128xf32>,
    %c1_i32_10 = arith.constant 1 : i32
    %c8_i32_11 = arith.constant 8 : i32
    %50 = arith.muli %c1_i32_10, %c8_i32_11 : i32
    %51 = arith.addi %0, %50 : i32
    %c0_i32_12 = arith.constant 0 : i32
    %52 = arith.addi %51, %c0_i32_12 : i32
    %53 = arith.index_cast %52 : i32 to index
    %54 = memref.load %arg1[%53] : memref<16xi32, #tpu.memory_space<smem>>
    %55 = arith.index_cast %54 : i32 to index
    %c0_13 = arith.constant 0 : index
    %56 = vector.load %arg2[%55, %c0_13] : memref<64x128xf32, #tpu.memory_space<vmem>>, vector<1x128xf32>
    %c1_i32_14 = arith.constant 1 : i32
    %57 = arith.addi %51, %c1_i32_14 : i32
    %58 = arith.index_cast %57 : i32 to index
    %59 = memref.load %arg1[%58] : memref<16xi32, #tpu.memory_space<smem>>
    %60 = arith.index_cast %59 : i32 to index
    %c0_15 = arith.constant 0 : index
    %61 = vector.load %arg2[%60, %c0_15] : memref<64x128xf32, #tpu.memory_space<vmem>>, vector<1x128xf32>
    %c2_i32_16 = arith.constant 2 : i32
    %62 = arith.addi %51, %c2_i32_16 : i32
    %63 = arith.index_cast %62 : i32 to index
    %64 = memref.load %arg1[%63] : memref<16xi32, #tpu.memory_space<smem>>
    %65 = arith.index_cast %64 : i32 to index
    %c0_17 = arith.constant 0 : index
    %66 = vector.load %arg2[%65, %c0_17] : memref<64x128xf32, #tpu.memory_space<vmem>>, vector<1x128xf32>
    %c3_i32_18 = arith.constant 3 : i32
    %67 = arith.addi %51, %c3_i32_18 : i32
    %68 = arith.index_cast %67 : i32 to index
    %69 = memref.load %arg1[%68] : memref<16xi32, #tpu.memory_space<smem>>
    %70 = arith.index_cast %69 : i32 to index
    %c0_19 = arith.constant 0 : index
    %71 = vector.load %arg2[%70, %c0_19] : memref<64x128xf32, #tpu.memory_space<vmem>>, vector<1x128xf32>
    %c4_i32_20 = arith.constant 4 : i32
    %72 = arith.addi %51, %c4_i32_20 : i32
    %73 = arith.index_cast %72 : i32 to index
    %74 = memref.load %arg1[%73] : memref<16xi32, #tpu.memory_space<smem>>
    %75 = arith.index_cast %74 : i32 to index
    %c0_21 = arith.constant 0 : index
    %76 = vector.load %arg2[%75, %c0_21] : memref<64x128xf32, #tpu.memory_space<vmem>>, vector<1x128xf32>
    %c5_i32_22 = arith.constant 5 : i32
    %77 = arith.addi %51, %c5_i32_22 : i32
    %78 = arith.index_cast %77 : i32 to index
    %79 = memref.load %arg1[%78] : memref<16xi32, #tpu.memory_space<smem>>
    %80 = arith.index_cast %79 : i32 to index
    %c0_23 = arith.constant 0 : index
    %81 = vector.load %arg2[%80, %c0_23] : memref<64x128xf32, #tpu.memory_space<vmem>>, vector<1x128xf32>
    %c6_i32_24 = arith.constant 6 : i32
    %82 = arith.addi %51, %c6_i32_24 : i32
    %83 = arith.index_cast %82 : i32 to index
    %84 = memref.load %arg1[%83] : memref<16xi32, #tpu.memory_space<smem>>
    %85 = arith.index_cast %84 : i32 to index
    %c0_25 = arith.constant 0 : index
    %86 = vector.load %arg2[%85, %c0_25] : memref<64x128xf32, #tpu.memory_space<vmem>>, vector<1x128xf32>
    %c7_i32_26 = arith.constant 7 : i32
    %87 = arith.addi %51, %c7_i32_26 : i32
    %88 = arith.index_cast %87 : i32 to index
    %89 = memref.load %arg1[%88] : memref<16xi32, #tpu.memory_space<smem>>
    %90 = arith.index_cast %89 : i32 to index
    %c0_27 = arith.constant 0 : index
    %91 = vector.load %arg2[%90, %c0_27] : memref<64x128xf32, #tpu.memory_space<vmem>>, vector<1x128xf32>
    %92 = tpu.concatenate %56, %61, %66, %71, %76, %81, %86, %91 in 0 : vector<1x128xf32>, vector<1x128xf32>, vector<1x128xf32>, vector<1x128xf32>, vector<1x128xf32>, vector<1x128xf32>, vector<1x128xf32>, vector<1x128xf32> -> vector<8x128xf32>
    %cst_28 = arith.constant 11.3137083 : f32
    %93 = vector.broadcast %cst_28 : f32 to vector<8x128xf32>
    %94 = arith.mulf %92, %93 : vector<8x128xf32>
    %c8_i32_29 = arith.constant 8 : i32
    %95 = arith.muli %c1_i32_10, %c8_i32_29 : i32
    %96 = tpu.assume_multiple %95, 8 : i32
    %97 = arith.index_cast %96 : i32 to index
    %c0_30 = arith.constant 0 : index
    %98 = vector.load %arg3[%97, %c0_30] : memref<16x128xf32, #tpu.memory_space<vmem>>, vector<8x128xf32>
    tpu.vector_store %arg3[%97, %c0_30], %94 {strides = array<i32>} : memref<16x128xf32, #tpu.memory_space<vmem>>, vector<8x128xf32>,
    %c2_i32_31 = arith.constant 2 : i32
    return
  }
  func.func @transform_0(%arg0: i32, %arg1: memref<16xi32, #tpu.memory_space<smem>>) -> (i32, i32) {
    %c0_i32 = arith.constant 0 : i32
    %c0_i32_0 = arith.constant 0 : i32
    %c0_i32_1 = arith.constant 0 : i32
    return %c0_i32, %c0_i32_0 : i32, i32
  }
  func.func @transform_1(%arg0: i32, %arg1: memref<16xi32, #tpu.memory_space<smem>>) -> (i32, i32) {
    %c0_i32 = arith.constant 0 : i32
    %c0_i32_0 = arith.constant 0 : i32
    return %arg0, %c0_i32 : i32, i32
  }
}

</mosaic_0001>

<llo_original>
// kernel: tpu_custom_call.1
$region0: #{tpu_custom_call.1}
  #allocation0 [shape = 'u32[]', space=smem, size = 0x4, offset = 0x4, fixed_abs, tag = 'smem constant byte address 0x4 - core index']
  #allocation1 [shape = 'u32[72,128]{1,0:T(1,128)}', space=vmem, size = 0x9000, scoped, tag = 'internal scratch']
  #allocation2 [shape = 's32[1]{0}', space=sflag, size = 0x4, scoped, tag = 'scoped memory for tpu_custom_call.1']
  #allocation3 [shape = 'u8[512]{0}', space=smem, size = 0x200, scoped, tag = 'prefetched SMEM operand 0']
  %s0 = inlined_call_operand.hbm [shape: s32[16], index: 0, kind: input, shape index: {}]
  %s1 = inlined_call_operand.hbm [shape: f32[64,128], index: 1, kind: input, shape index: {}]
  %s2 = inlined_call_operand.hbm [shape: f32[16,128], index: 2, kind: output, shape index: {}]
  %s3 = sld [smem:[#allocation0]]
  $region18: #{tpu_custom_call.1} parent=0
    _
  %s5 = ssub.s32 1, %s3
  %s6 = scalar_select 0, %s5, %s3
  %s8 = sshll.u32 %s0, 4
  %s9 = int_to_ptr.hbm [resolvable:$true] %s8
  %11 = dma.hbm_to_smem %s9, 16, [#allocation3], [#allocation2]
  %13 = dma.done [#allocation2], 16
  %14 = sfence
  $region1: #{tpu_custom_call.1} parent=0
    #allocation4 [shape = 'u8[32768]{0}', space=vmem, size = 0x8000, scoped, tag = 'input window, operand 1, single buffered']
    #allocation5 [shape = 's32[1]{0}', space=sflag, size = 0x4, scoped, tag = 'scoped memory for tpu_custom_call.1']
    #allocation6 [shape = 's32[1]{0}', space=sflag, size = 0x4, scoped, tag = 'scoped memory for tpu_custom_call.1']
    #allocation7 [shape = 'u8[8192]{0}', space=vmem, size = 0x2000, scoped, tag = 'output window, operand 0, single buffered']
    %15 = vsyncpa [#allocation5], 0
    %16 = vsyncpa [#allocation6], 0
    // Predicated region
    $region2: #{tpu_custom_call.1} parent=1 // pred_check
      _
    $region3: #{tpu_custom_call.1} parent=1 // pred_check_branch
      %18 = sbr.rel (0) target = $region5
    $region4: #{tpu_custom_call.1} parent=1 // pred_region
      %20 = vsyncadd [#allocation5], 0
      %s21 = sshll.u32 %s1, 4
      %s22 = int_to_ptr.hbm [resolvable:$true] %s21
      %s23 = sshll.u32 [#allocation4], 4
      %s24 = int_to_ptr.vmem [resolvable:$true] %s23
      %29 = dma.hbm_to_vmem [thread:$0]  %s22, 1024, %s24, [#allocation5], 128, 128, 8
    $region5: #{tpu_custom_call.1} parent=1 // pred_fallthru
      _
    // Predicated region
    $region6: #{tpu_custom_call.1} parent=1 // pred_check
      _
    $region7: #{tpu_custom_call.1} parent=1 // pred_check_branch
      %31 = sbr.rel (0) target = $region9
    $region8: #{tpu_custom_call.1} parent=1 // pred_region
      %33 = dma.done [#allocation5], 1024
    $region9: #{tpu_custom_call.1} parent=1 // pred_fallthru
      _
    %s34 = smul.u32 0, 16
    %s35 = sld [smem:[#allocation3 + %s34]]
    %s36 = scalar_lea.vmem [#allocation4], %s35
    %v37 = vld [vmem:[%s36] sm:$0x1]
    %s38 = sadd.s32 %s34, 1
    %s39 = sld [smem:[#allocation3 + %s38]]
    %s40 = scalar_lea.vmem [#allocation4], %s39
    %v41 = vld [vmem:[%s40] sm:$0x1]
    %s42 = sadd.s32 %s34, 2
    %s43 = sld [smem:[#allocation3 + %s42]]
    %s44 = scalar_lea.vmem [#allocation4], %s43
    %v45 = vld [vmem:[%s44] sm:$0x1]
    %s46 = sadd.s32 %s34, 3
    %s47 = sld [smem:[#allocation3 + %s46]]
    %s48 = scalar_lea.vmem [#allocation4], %s47
    %v49 = vld [vmem:[%s48] sm:$0x1]
    %s50 = sadd.s32 %s34, 4
    %s51 = sld [smem:[#allocation3 + %s50]]
    %s52 = scalar_lea.vmem [#allocation4], %s51
    %v53 = vld [vmem:[%s52] sm:$0x1]
    %s54 = sadd.s32 %s34, 5
    %s55 = sld [smem:[#allocation3 + %s54]]
    %s56 = scalar_lea.vmem [#allocation4], %s55
    %v57 = vld [vmem:[%s56] sm:$0x1]
    %s58 = sadd.s32 %s34, 6
    %s59 = sld [smem:[#allocation3 + %s58]]
    %s60 = scalar_lea.vmem [#allocation4], %s59
    %v61 = vld [vmem:[%s60] sm:$0x1]
    %s62 = sadd.s32 %s34, 7
    %s63 = sld [smem:[#allocation3 + %s62]]
    %s64 = scalar_lea.vmem [#allocation4], %s63
    %v65 = vld [vmem:[%s64] sm:$0x1]
    %v67 = vrot.slane %v41, 7
    %v70 = vrot.slane %v45, 6
    %v73 = vrot.slane %v49, 5
    %v76 = vrot.slane %v53, 4
    %v79 = vrot.slane %v57, 3
    %v82 = vrot.slane %v61, 2
    %v85 = vrot.slane %v65, 1
    %vm87 = vcmask 1040384
    %v88 = vsel %vm87, %v37, %v67
    %vm89 = vcmask 1041408
    %v90 = vsel %vm89, %v88, %v70
    %vm91 = vcmask 1042432
    %v92 = vsel %vm91, %v90, %v73
    %vm93 = vcmask 1043456
    %v94 = vsel %vm93, %v92, %v76
    %vm95 = vcmask 1044480
    %v96 = vsel %vm95, %v94, %v79
    %vm97 = vcmask 1045504
    %v98 = vsel %vm97, %v96, %v82
    %vm99 = vcmask 1046528
    %v100 = vsel %vm99, %v98, %v85
    %v101 = vmul.f32 %v100, 11.313708
    %102 = vst [vmem:[#allocation7] sm:$0xff] %v101
    %s103 = sadd.s32 %s34, 8
    %s104 = sld [smem:[#allocation3 + %s103]]
    %s105 = scalar_lea.vmem [#allocation4], %s104
    %v106 = vld [vmem:[%s105] sm:$0x1]
    %s107 = sadd.s32 %s34, 9
    %s108 = sld [smem:[#allocation3 + %s107]]
    %s109 = scalar_lea.vmem [#allocation4], %s108
    %v110 = vld [vmem:[%s109] sm:$0x1]
    %s111 = sadd.s32 %s34, 10
    %s112 = sld [smem:[#allocation3 + %s111]]
    %s113 = scalar_lea.vmem [#allocation4], %s112
    %v114 = vld [vmem:[%s113] sm:$0x1]
    %s115 = sadd.s32 %s34, 11
    %s116 = sld [smem:[#allocation3 + %s115]]
    %s117 = scalar_lea.vmem [#allocation4], %s116
    %v118 = vld [vmem:[%s117] sm:$0x1]
    %s119 = sadd.s32 %s34, 12
    %s120 = sld [smem:[#allocation3 + %s119]]
    %s121 = scalar_lea.vmem [#allocation4], %s120
    %v122 = vld [vmem:[%s121] sm:$0x1]
    %s123 = sadd.s32 %s34, 13
    %s124 = sld [smem:[#allocation3 + %s123]]
    %s125 = scalar_lea.vmem [#allocation4], %s124
    %v126 = vld [vmem:[%s125] sm:$0x1]
    %s127 = sadd.s32 %s34, 14
    %s128 = sld [smem:[#allocation3 + %s127]]
    %s129 = scalar_lea.vmem [#allocation4], %s128
    %v130 = vld [vmem:[%s129] sm:$0x1]
    %s131 = sadd.s32 %s34, 15
    %s132 = sld [smem:[#allocation3 + %s131]]
    %s133 = scalar_lea.vmem [#allocation4], %s132
    %v134 = vld [vmem:[%s133] sm:$0x1]
    %v136 = vrot.slane %v110, 7
    %v139 = vrot.slane %v114, 6
    %v142 = vrot.slane %v118, 5
    %v145 = vrot.slane %v122, 4
    %v148 = vrot.slane %v126, 3
    %v151 = vrot.slane %v130, 2
    %v154 = vrot.slane %v134, 1
    %v156 = vsel %vm87, %v106, %v136
    %v157 = vsel %vm89, %v156, %v139
    %v158 = vsel %vm91, %v157, %v142
    %v159 = vsel %vm93, %v158, %v145
    %v160 = vsel %vm95, %v159, %v148
    %v161 = vsel %vm97, %v160, %v151
    %v162 = vsel %vm99, %v161, %v154
    %v163 = vmul.f32 %v162, 11.313708
    %s164 = scalar_lea.vmem [#allocation7], 8
    %165 = vst [vmem:[%s164] sm:$0xff] %v163
    // Predicated region
    $region10: #{tpu_custom_call.1} parent=1 // pred_check
      _
    $region11: #{tpu_custom_call.1} parent=1 // pred_check_branch
      %167 = sbr.rel (0) target = $region13
    $region12: #{tpu_custom_call.1} parent=1 // pred_region
      %169 = vsyncadd [#allocation6], 0
      %s170 = sshll.u32 [#allocation7], 4
      %s171 = int_to_ptr.vmem [resolvable:$true] %s170
      %s172 = sshll.u32 %s2, 4
      %s173 = int_to_ptr.hbm [resolvable:$true] %s172
      %178 = dma.vmem_to_hbm [thread:$0]  %s171, 256, %s173, [#allocation6], 128, 128, 8
    $region13: #{tpu_custom_call.1} parent=1 // pred_fallthru
      _
    // Predicated region
    $region14: #{tpu_custom_call.1} parent=1 // pred_check
      _
    $region15: #{tpu_custom_call.1} parent=1 // pred_check_branch
      %180 = sbr.rel (0) target = $region17
    $region16: #{tpu_custom_call.1} parent=1 // pred_region
      %182 = dma.done [#allocation6], 256
    $region17: #{tpu_custom_call.1} parent=1 // pred_fallthru
      _
    %183 = vsyncpa [#allocation5], 1
    %184 = vsyncpa [#allocation6], 1

</llo_original>
